<compile_context>
chip_gen: v7x
topology: tpu7x:2x2x1
jax: 0.10.0
libtpu: 0.0.40
codegen_flags: <defaults>
</compile_context>

<pallas_src>
import functools

import jax
import jax.numpy as jnp
import numpy as np
from jax.experimental import pallas as pl
from jax.experimental.pallas import tpu as pltpu


def _pool_kernel(x_ref, avg_ref, max_ref, sum_acc, max_acc, *,
                 tl, lane_w, length, inv_len, ragged):
    """Grid: axis 0 = row blocks of x2d (parallel), axis 1 = L tiles (reduce).

    Produces per-row mean and max over L for an (R, tl) tile stream.
    """
    l = pl.program_id(1)

    @pl.when(l == 0)
    def _init():
        sum_acc[...] = jnp.zeros_like(sum_acc)
        max_acc[...] = jnp.full_like(max_acc, -jnp.inf)

    rows = sum_acc.shape[0]
    n_slab = tl // lane_w          # full lane_w-wide slabs per tile
    tail_w = tl % lane_w           # nonzero only when tl == L (single L step)
    n_pair = n_slab // 2

    if ragged:                     # only when L % tl != 0 (last step has OOB lanes)
        lanes = jax.lax.broadcasted_iota(jnp.int32, (rows, lane_w), 1)
        tile_base = l * tl

    def load_slab(off):
        slab = x_ref[:, pl.ds(off, lane_w)].astype(jnp.float32)
        if ragged:
            valid = lanes < (length - (tile_base + off))
            return jnp.where(valid, slab, 0.0), jnp.where(valid, slab, -jnp.inf)
        return slab, slab

    # Scratch is touched exactly once per grid step on each side: load here,
    # accumulate in vregs (two independent pairs), store back below.
    s0 = sum_acc[...]
    m0 = max_acc[...]
    s1 = jnp.zeros((rows, lane_w), jnp.float32)
    m1 = jnp.full((rows, lane_w), -jnp.inf, jnp.float32)

    def pair_body(j, carry):
        s0, m0, s1, m1 = carry
        off_a = pl.multiple_of(j * (2 * lane_w), lane_w)
        off_b = pl.multiple_of(j * (2 * lane_w) + lane_w, lane_w)
        a_s, a_m = load_slab(off_a)
        b_s, b_m = load_slab(off_b)
        return (s0 + a_s, jnp.maximum(m0, a_m),
                s1 + b_s, jnp.maximum(m1, b_m))

    if n_pair > 0:
        s0, m0, s1, m1 = jax.lax.fori_loop(
            0, n_pair, pair_body, (s0, m0, s1, m1), unroll=min(4, n_pair))

    if n_slab % 2:                                   # static odd trailing slab
        t_s, t_m = load_slab((n_slab - 1) * lane_w)
        s1 = s1 + t_s
        m1 = jnp.maximum(m1, t_m)

    if tail_w:                                       # static ragged-tile tail
        # Only when tl == L (single L step, lane_w == 128, ragged is False):
        # load the final full 128-lane window ending at tl and statically mask
        # out the part already covered by the last full slab (no partial-lane
        # loads/stores anywhere).
        keep = (jax.lax.broadcasted_iota(jnp.int32, (rows, lane_w), 1)
                >= (lane_w - tail_w))
        win = x_ref[:, pl.ds(tl - lane_w, lane_w)].astype(jnp.float32)
        s1 = s1 + jnp.where(keep, win, 0.0)
        m1 = jnp.maximum(m1, jnp.where(keep, win, -jnp.inf))

    s = s0 + s1
    m = jnp.maximum(m0, m1)
    sum_acc[...] = s
    max_acc[...] = m

    @pl.when(l == pl.num_programs(1) - 1)
    def _finalize():
        # Single cross-lane (XLU) reduce per row block.
        avg_ref[...] = jnp.sum(s, axis=-1, keepdims=True) * inv_len
        max_ref[...] = jnp.max(m, axis=-1, keepdims=True)


def _pick_tile(L, cap):
    """L tile: a multiple of 128 (or the full L).  Prefers exact tiling so the
    hot loop stays unmasked; falls back to `cap` plus in-kernel lane masking."""
    cap = max(128, (int(cap) // 128) * 128)
    if L <= cap:
        return L                       # single L step, full-extent block (legal)
    t = cap
    while t >= 128:                    # largest lane-aligned divisor of L <= cap
        if L % t == 0:
            return t
        t -= 128
    return cap                         # no aligned divisor: mask the ragged tail


def frame_attention(x, w1, b1, w2, *, max_tl=32768, block_rows=8):
    """x: (B, nframe, L); w1: (nframe//2, nframe); b1: (nframe//2,);
    w2: (nframe, nframe//2).  Returns (B, nframe, 1) float32."""
    B, C, L = x.shape
    nrows = B * C
    x2d = x.reshape(nrows, L)                    # free row-major view, no relayout

    tl = _pick_tile(L, max_tl)
    num_l = -(-L // tl)
    ragged = (L % tl) != 0
    lane_w = min(128, tl)
    R = block_rows if nrows >= block_rows else nrows   # full extent when tiny
    num_r = -(-nrows // R)
    nrows_pad = num_r * R

    kernel = functools.partial(
        _pool_kernel, tl=tl, lane_w=lane_w, length=L, inv_len=1.0 / L,
        ragged=ragged)

    cost = pl.CostEstimate(
        flops=int(2 * nrows * L),                       # streaming add + max
        transcendentals=0,
        bytes_accessed=int(x.size * x.dtype.itemsize + 2 * nrows_pad * 4))

    avg_p, max_p = pl.pallas_call(
        kernel,
        out_shape=(jax.ShapeDtypeStruct((nrows_pad, 1), jnp.float32),
                   jax.ShapeDtypeStruct((nrows_pad, 1), jnp.float32)),
        grid_spec=pltpu.PrefetchScalarGridSpec(
            num_scalar_prefetch=0,
            grid=(num_r, num_l),
            in_specs=[pl.BlockSpec((R, tl), lambda r, l: (r, l))],
            out_specs=(pl.BlockSpec((R, 1), lambda r, l: (r, 0)),
                       pl.BlockSpec((R, 1), lambda r, l: (r, 0))),
            scratch_shapes=[pltpu.VMEM((R, lane_w), jnp.float32),
                            pltpu.VMEM((R, lane_w), jnp.float32)],
        ),
        compiler_params=pltpu.CompilerParams(
            dimension_semantics=("parallel", "arbitrary")),
        cost_estimate=cost,
    )(x2d)

    avg = avg_p[:nrows, 0].reshape(B, C)
    mx = max_p[:nrows, 0].reshape(B, C)

    # Tiny (B, C) epilogue kept in plain JAX per perf review: fc1 + bias + ReLU
    # per branch, fc2 (bias=False per module spec) fused across branches since
    # it is linear, then sigmoid.
    # TODO(synk): nn.Dropout(p=0.2) omitted (eval-mode identity).
    w1 = jnp.asarray(w1, jnp.float32)
    b1 = jnp.asarray(b1, jnp.float32)
    w2 = jnp.asarray(w2, jnp.float32)
    a1 = jnp.maximum(avg @ w1.T + b1[None, :], 0.0)
    m1 = jnp.maximum(mx @ w1.T + b1[None, :], 0.0)
    out = jax.nn.sigmoid((a1 + m1) @ w2.T)             # (B, C)
    return out[:, :, None]                             # (B, nframe, 1)


def _reference(x, w1, b1, w2):
    """Pure-JAX reference mirroring the PyTorch forward (eval mode)."""
    x = jnp.asarray(x, jnp.float32)
    avg = jnp.mean(x, axis=-1)                         # (B, C)
    mx = jnp.max(x, axis=-1)                           # (B, C)

    def branch(v):
        return jnp.maximum(v @ w1.T + b1[None, :], 0.0)

    out = jax.nn.sigmoid((branch(avg) + branch(mx)) @ w2.T)
    return out[:, :, None]


if __name__ == "__main__":
    nframe = 5
    B = 2

    key = jax.random.PRNGKey(0)
    kx, k1, k2, k3 = jax.random.split(key, 4)

    # Deterministic parameter init (Conv1d-style uniform, kernel size 1).
    fan1 = nframe
    w1 = jax.random.uniform(k1, (nframe // 2, nframe), jnp.float32,
                            -1.0 / np.sqrt(fan1), 1.0 / np.sqrt(fan1))
    b1 = jax.random.uniform(k2, (nframe // 2,), jnp.float32,
                            -1.0 / np.sqrt(fan1), 1.0 / np.sqrt(fan1))
    fan2 = nframe // 2
    w2 = jax.random.uniform(k3, (nframe, nframe // 2), jnp.float32,
                            -1.0 / np.sqrt(fan2), 1.0 / np.sqrt(fan2))

    # 1) f32, aligned L, multi-step reduction (max_tl=256 -> grid (2, 4)).
    x = jax.random.normal(kx, (B, nframe, 1024), jnp.float32)
    ref = _reference(x, w1, b1, w2)
    out = jax.block_until_ready(frame_attention(x, w1, b1, w2, max_tl=256))
    assert out.shape == (B, nframe, 1)
    assert np.allclose(np.asarray(out), np.asarray(ref), atol=1e-5, rtol=1e-5)

    # 2) bf16 streaming path (single 1024-lane step; cast to f32 per slab).
    out_bf16 = jax.block_until_ready(
        frame_attention(x.astype(jnp.bfloat16), w1, b1, w2))
    assert np.allclose(np.asarray(out_bf16), np.asarray(ref), atol=5e-2)

    # 3) ragged L=1000 with a 512 tile: exercises the dynamically masked last step.
    x2 = jax.random.normal(kx, (B, nframe, 1000), jnp.float32)
    ref2 = _reference(x2, w1, b1, w2)
    out2 = jax.block_until_ready(frame_attention(x2, w1, b1, w2, max_tl=512))
    assert np.allclose(np.asarray(out2), np.asarray(ref2), atol=1e-5, rtol=1e-5)

    # 4) ragged L=1000 as a single full-extent tile: exercises the static tail mask.
    out3 = jax.block_until_ready(frame_attention(x2, w1, b1, w2))
    assert np.allclose(np.asarray(out3), np.asarray(ref2), atol=1e-5, rtol=1e-5)

    print("KERNEL_OK")
</pallas_src>

<mosaic_0001>
module attributes {stable_mosaic.version = 11 : i64} {
  func.func @_pool_kernel(%arg0: i32, %arg1: i32, %arg2: memref<8x256xf32, #tpu.memory_space<vmem>>, %arg3: memref<8x1xf32, #tpu.memory_space<vmem>>, %arg4: memref<8x1xf32, #tpu.memory_space<vmem>>, %arg5: memref<8x128xf32, #tpu.memory_space<vmem>>, %arg6: memref<8x128xf32, #tpu.memory_space<vmem>>) attributes {dimension_semantics = [#tpu.dimension_semantics<parallel>, #tpu.dimension_semantics<arbitrary>], iteration_bounds = array<i64: 2, 4>, scalar_prefetch = 0 : i64, scratch_operands = 2 : i64, tpu.core_type = #tpu.core_type<tc>, window_params = [{transform_indices = @transform_0, window_bounds = array<i64: 8, 256>}, {transform_indices = @transform_1, window_bounds = array<i64: 8, 1>}, {transform_indices = @transform_2, window_bounds = array<i64: 8, 1>}]} {
    %c0_i32 = arith.constant 0 : i32
    %0 = arith.cmpi eq, %arg1, %c0_i32 : i32
    %1 = arith.extui %0 : i1 to i32
    %c0_i32_0 = arith.constant 0 : i32
    %2 = arith.cmpi ne, %1, %c0_i32_0 : i32
    scf.if %2 {
      %cst_14 = arith.constant 0.000000e+00 : f32
      %27 = vector.broadcast %cst_14 : f32 to vector<8x128xf32>
      %c0_15 = arith.constant 0 : index
      %c0_16 = arith.constant 0 : index
      %28 = vector.load %arg5[%c0_15, %c0_16] : memref<8x128xf32, #tpu.memory_space<vmem>>, vector<8x128xf32>
      tpu.vector_store %arg5[%c0_15, %c0_16], %27 {strides = array<i32>} : memref<8x128xf32, #tpu.memory_space<vmem>>, vector<8x128xf32>,
      %cst_17 = arith.constant 0xFF800000 : f32
      %29 = vector.broadcast %cst_17 : f32 to vector<8x128xf32>
      %c0_18 = arith.constant 0 : index
      %c0_19 = arith.constant 0 : index
      %30 = vector.load %arg6[%c0_18, %c0_19] : memref<8x128xf32, #tpu.memory_space<vmem>>, vector<8x128xf32>
      tpu.vector_store %arg6[%c0_18, %c0_19], %29 {strides = array<i32>} : memref<8x128xf32, #tpu.memory_space<vmem>>, vector<8x128xf32>,
    } else {
    }
    %c0 = arith.constant 0 : index
    %c0_1 = arith.constant 0 : index
    %3 = vector.load %arg5[%c0, %c0_1] : memref<8x128xf32, #tpu.memory_space<vmem>>, vector<8x128xf32>
    %c0_2 = arith.constant 0 : index
    %c0_3 = arith.constant 0 : index
    %4 = vector.load %arg6[%c0_2, %c0_3] : memref<8x128xf32, #tpu.memory_space<vmem>>, vector<8x128xf32>
    %cst = arith.constant 0.000000e+00 : f32
    %5 = vector.broadcast %cst : f32 to vector<8x128xf32>
    %cst_4 = arith.constant 0xFF800000 : f32
    %6 = vector.broadcast %cst_4 : f32 to vector<8x128xf32>
    %c0_i32_5 = arith.constant 0 : i32
    %c256_i32 = arith.constant 256 : i32
    %7 = arith.muli %c0_i32_5, %c256_i32 : i32
    %8 = tpu.assume_multiple %7, 128 : i32
    %c256_i32_6 = arith.constant 256 : i32
    %9 = arith.muli %c0_i32_5, %c256_i32_6 : i32
    %c128_i32 = arith.constant 128 : i32
    %10 = arith.addi %9, %c128_i32 : i32
    %11 = tpu.assume_multiple %10, 128 : i32
    %c0_7 = arith.constant 0 : index
    %12 = arith.index_cast %8 : i32 to index
    %13 = vector.load %arg2[%c0_7, %12] : memref<8x256xf32, #tpu.memory_space<vmem>>, vector<8x128xf32>
    %c0_8 = arith.constant 0 : index
    %14 = arith.index_cast %11 : i32 to index
    %15 = vector.load %arg2[%c0_8, %14] : memref<8x256xf32, #tpu.memory_space<vmem>>, vector<8x128xf32>
    %16 = arith.addf %3, %13 : vector<8x128xf32>
    %17 = arith.maximumf %4, %13 : vector<8x128xf32>
    %18 = arith.addf %5, %15 : vector<8x128xf32>
    %19 = arith.maximumf %6, %15 : vector<8x128xf32>
    %c1_i32 = arith.constant 1 : i32
    %20 = arith.addf %16, %18 : vector<8x128xf32>
    %21 = arith.maximumf %17, %19 : vector<8x128xf32>
    %c0_9 = arith.constant 0 : index
    %c0_10 = arith.constant 0 : index
    %22 = vector.load %arg5[%c0_9, %c0_10] : memref<8x128xf32, #tpu.memory_space<vmem>>, vector<8x128xf32>
    tpu.vector_store %arg5[%c0_9, %c0_10], %20 {strides = array<i32>} : memref<8x128xf32, #tpu.memory_space<vmem>>, vector<8x128xf32>,
    %c0_11 = arith.constant 0 : index
    %c0_12 = arith.constant 0 : index
    %23 = vector.load %arg6[%c0_11, %c0_12] : memref<8x128xf32, #tpu.memory_space<vmem>>, vector<8x128xf32>
    tpu.vector_store %arg6[%c0_11, %c0_12], %21 {strides = array<i32>} : memref<8x128xf32, #tpu.memory_space<vmem>>, vector<8x128xf32>,
    %c3_i32 = arith.constant 3 : i32
    %24 = arith.cmpi eq, %arg1, %c3_i32 : i32
    %25 = arith.extui %24 : i1 to i32
    %c0_i32_13 = arith.constant 0 : i32
    %26 = arith.cmpi ne, %25, %c0_i32_13 : i32
    scf.if %26 {
      %cst_14 = arith.constant dense<0.000000e+00> : vector<8xf32>
      %27 = vector.multi_reduction <add>, %20, %cst_14 [1] : vector<8x128xf32> to vector<8xf32>
      %28 = vector.shape_cast %27 : vector<8xf32> to vector<8x1xf32>
      %cst_15 = arith.constant 9.765625E-4 : f32
      %29 = vector.broadcast %cst_15 : f32 to vector<8x1xf32>
      %30 = arith.mulf %28, %29 : vector<8x1xf32>
      %c0_16 = arith.constant 0 : index
      %c0_17 = arith.constant 0 : index
      %31 = vector.load %arg3[%c0_16, %c0_17] : memref<8x1xf32, #tpu.memory_space<vmem>>, vector<8x1xf32>
      tpu.vector_store %arg3[%c0_16, %c0_17], %30 {strides = array<i32>} : memref<8x1xf32, #tpu.memory_space<vmem>>, vector<8x1xf32>,
      %cst_18 = arith.constant dense<0xFF800000> : vector<8xf32>
      %32 = vector.multi_reduction <maximumf>, %21, %cst_18 [1] : vector<8x128xf32> to vector<8xf32>
      %33 = vector.shape_cast %32 : vector<8xf32> to vector<8x1xf32>
      %c0_19 = arith.constant 0 : index
      %c0_20 = arith.constant 0 : index
      %34 = vector.load %arg4[%c0_19, %c0_20] : memref<8x1xf32, #tpu.memory_space<vmem>>, vector<8x1xf32>
      tpu.vector_store %arg4[%c0_19, %c0_20], %33 {strides = array<i32>} : memref<8x1xf32, #tpu.memory_space<vmem>>, vector<8x1xf32>,
    } else {
    }
    return
  }
  func.func @transform_0(%arg0: i32, %arg1: i32) -> (i32, i32) {
    %c0_i32 = arith.constant 0 : i32
    return %arg0, %arg1 : i32, i32
  }
  func.func @transform_1(%arg0: i32, %arg1: i32) -> (i32, i32) {
    %c0_i32 = arith.constant 0 : i32
    %c0_i32_0 = arith.constant 0 : i32
    return %arg0, %c0_i32 : i32, i32
  }
  func.func @transform_2(%arg0: i32, %arg1: i32) -> (i32, i32) {
    %c0_i32 = arith.constant 0 : i32
    %c0_i32_0 = arith.constant 0 : i32
    return %arg0, %c0_i32 : i32, i32
  }
}

</mosaic_0001>

<llo_original>
// kernel: tpu_custom_call.1
$region0: #{tpu_custom_call.1}
  #allocation0 [shape = 'u32[]', space=smem, size = 0x4, offset = 0x4, fixed_abs, tag = 'smem constant byte address 0x4 - core index']
  #allocation1 [shape = 'u32[144,128]{1,0:T(1,128)}', space=vmem, size = 0x12000, scoped, tag = 'internal scratch']
  #allocation2 [shape = 'f32[8,128]{1,0:T(8,128)}', space=vmem, size = 0x1000, scoped, tag = 'scratch operand']
  #allocation3 [shape = 'f32[8,128]{1,0:T(8,128)}', space=vmem, size = 0x1000, scoped, tag = 'scratch operand']
  %s0 = inlined_call_operand.hbm [shape: f32[10,1024], index: 0, kind: input, shape index: {}]
  %s1 = inlined_call_operand.vmem [shape: f32[16,1], index: 1, kind: output, shape index: {0}]
  %s2 = inlined_call_operand.vmem [shape: f32[16,1], index: 2, kind: output, shape index: {1}]
  %3 = xla_tuple %s1, %s2
  %s4 = sld [smem:[#allocation0]]
  $region57: #{tpu_custom_call.1} parent=0
    _
  %s6 = ssub.s32 1, %s4
  %s7 = scalar_select 0, %s6, %s4
  $region1: #{tpu_custom_call.1} parent=0
    #allocation4 [shape = 'u8[16384]{0}', space=vmem, size = 0x4000, scoped, tag = 'input window, operand 0']
    #allocation5 [shape = 's32[2]{0}', space=sflag, size = 0x8, scoped, tag = 'scoped memory for tpu_custom_call.1']
    %8 = vsyncpa [#allocation5], 0
    %s9 = scalar_lea.sflag [#allocation5], 1
    %10 = vsyncpa %s9, 0
    loop: start=0, step=1, limit=10
    $region2: #{tpu_custom_call.1} parent=1 // loop_pre_header
      _
    $region3: #{tpu_custom_call.1} parent=1 // loop_header
      %s12 = sphi 0, %s16
      %p13 = scmp.ge.s32.totalorder %s12, 10
      %s19 = sphi 0, %s31
      %s20 = sphi 0, %s27
      %s21 = sphi 0, %s19
      %s22 = sphi 0, %s20
      %s23 = sphi 0, %s21
      %s24 = sphi 0, %s22
      %s36 = sphi 0, %s38
      %s39 = sphi 0, %s36
      %s40 = sphi 0, %s39
      %s56 = sphi 0, %s40
      %s62 = sphi 0, %s64
      %s65 = sphi 0, %s62
      %s66 = sphi 0, %s65
      %s82 = sphi 0, %s66
      %s88 = sphi 0, %s90
      %s91 = sphi 0, %s88
      %s92 = sphi 0, %s91
      %s108 = sphi 0, %s92
    $region4: #{tpu_custom_call.1} parent=1 // loop_header_branch
      %15 = sbr.rel (%p13) target = $region8
    $region5: #{tpu_custom_call.1} parent=1 // loop_body
      %s17 = ssub.s32 %s12, 1
      %s18 = ssub.s32 %s12, 2
      %s25 = sadd.s32 1, %s20
      %p26 = scmp.ge.s32.totalorder %s25, 4
      %s27 = scalar_select %p26, 0, %s25
      %s28 = sadd.s32 1, %s19
      %s29 = scalar_select %p26, %s28, %s19
      %p30 = scmp.ge.s32.totalorder %s29, 2
      %s31 = scalar_select %p30, 0, %s29
      %s32 = ssub.s32 %s19, %s31
      %s33 = ssub.s32 %s20, %s27
      %s34 = sor.u32 %s32, %s33
      %p35 = scmp.eq.s32.totalorder %s34, 0
      %s37 = sadd.s32 %s36, 1
      %s38 = scalar_select %p35, %s36, %s37
      %p41 = pneg %p35
      %p42 = scmp.eq.s32.totalorder %s12, 7
      %p43 = por %p41, %p42
      %p44 = scmp.ne.s32.totalorder %s36, %s39
      %p45 = scmp.eq.s32.totalorder %s12, 0
      %p46 = por %p44, %p45
      %p47 = scmp.ne.s32.totalorder %s36, %s39
      %p48 = scmp.eq.s32.totalorder %s17, 7
      %p49 = por %p47, %p48
      %p50 = scmp.ne.s32.totalorder %s39, %s40
      %p51 = scmp.eq.s32.totalorder %s17, 0
      %p52 = por %p50, %p51
      %p53 = scmp.ne.s32.totalorder %s39, %s40
      %p54 = scmp.eq.s32.totalorder %s18, 7
      %p55 = por %p53, %p54
      %p57 = scmp.ne.s32.totalorder %s40, %s56
      %p58 = scmp.eq.s32.totalorder %s18, 0
      %p59 = por %p57, %p58
      %s60 = ssub.s32 %s19, %s31
      %p61 = scmp.eq.s32.totalorder %s60, 0
      %s63 = sadd.s32 %s62, 1
      %s64 = scalar_select %p61, %s62, %s63
      %p67 = pneg %p61
      %p68 = scmp.eq.s32.totalorder %s12, 7
      %p69 = por %p67, %p68
      %p70 = scmp.ne.s32.totalorder %s62, %s65
      %p71 = scmp.eq.s32.totalorder %s12, 0
      %p72 = por %p70, %p71
      %p73 = scmp.ne.s32.totalorder %s62, %s65
      %p74 = scmp.eq.s32.totalorder %s17, 7
      %p75 = por %p73, %p74
      %p76 = scmp.ne.s32.totalorder %s65, %s66
      %p77 = scmp.eq.s32.totalorder %s17, 0
      %p78 = por %p76, %p77
      %p79 = scmp.ne.s32.totalorder %s65, %s66
      %p80 = scmp.eq.s32.totalorder %s18, 7
      %p81 = por %p79, %p80
      %p83 = scmp.ne.s32.totalorder %s66, %s82
      %p84 = scmp.eq.s32.totalorder %s18, 0
      %p85 = por %p83, %p84
      %s86 = ssub.s32 %s19, %s31
      %p87 = scmp.eq.s32.totalorder %s86, 0
      %s89 = sadd.s32 %s88, 1
      %s90 = scalar_select %p87, %s88, %s89
      %p93 = pneg %p87
      %p94 = scmp.eq.s32.totalorder %s12, 7
      %p95 = por %p93, %p94
      %p96 = scmp.ne.s32.totalorder %s88, %s91
      %p97 = scmp.eq.s32.totalorder %s12, 0
      %p98 = por %p96, %p97
      %p99 = scmp.ne.s32.totalorder %s88, %s91
      %p100 = scmp.eq.s32.totalorder %s17, 7
      %p101 = por %p99, %p100
      %p102 = scmp.ne.s32.totalorder %s91, %s92
      %p103 = scmp.eq.s32.totalorder %s17, 0
      %p104 = por %p102, %p103
      %p105 = scmp.ne.s32.totalorder %s91, %s92
      %p106 = scmp.eq.s32.totalorder %s18, 7
      %p107 = por %p105, %p106
      %p109 = scmp.ne.s32.totalorder %s92, %s108
      %p110 = scmp.eq.s32.totalorder %s18, 0
      %p111 = por %p109, %p110
      %p112 = scmp.le.s32.totalorder 1, %s12
      %p113 = scmp.lt.s32.totalorder %s12, 9
      %p114 = pnand %p112, %p113
      %p115 = pneg %p114
      // Predicated region
      $region9: #{tpu_custom_call.1} parent=5 // pred_check
        _
      $region10: #{tpu_custom_call.1} parent=5 // pred_check_branch
        %117 = sbr.rel (%p114) target = $region12
      $region11: #{tpu_custom_call.1} parent=5 // pred_region
        %s118 = ssub.s32 %s12, 1
      $region12: #{tpu_custom_call.1} parent=5 // pred_fallthru
        _
      %p119 = scmp.lt.s32.totalorder %s12, 8
      // Predicated region
      $region13: #{tpu_custom_call.1} parent=5 // pred_check
        %p120 = pneg %p119
      $region14: #{tpu_custom_call.1} parent=5 // pred_check_branch
        %122 = sbr.rel (%p120) target = $region16
      $region15: #{tpu_custom_call.1} parent=5 // pred_region
        // Predicated region
        $region17: #{tpu_custom_call.1} parent=15 // pred_check
          %p123 = pneg %p46
        $region18: #{tpu_custom_call.1} parent=15 // pred_check_branch
          %125 = sbr.rel (%p123) target = $region20
        $region19: #{tpu_custom_call.1} parent=15 // pred_region
          %s126 = sand.u32 %s36, 1
          %s127 = scalar_lea.sflag [#allocation5], %s126
          %s128 = sand.u32 %s36, 1
          %s129 = smul.addr %s128, 16
          %s130 = scalar_lea.vmem [#allocation4], %s129
          %s131 = smul.u32 2, %s20
          %s133 = ssub.s32 256, 256
          %134 = vsyncadd %s127, %s133
          %s135 = smul.addr %s19, 8
          %s136 = sadd.s32 %s131, %s135
          %s137 = smul.addr %s136, 128
          %s138 = scalar_lea.hbm %s0, %s137
          %s140 = sshll.u32 %s130, 4
          %s141 = int_to_ptr.vmem [resolvable:$true] %s140
          %143 = dma.hbm_to_vmem [thread:$0]  %s138, 256, %s141, %s127
        $region20: #{tpu_custom_call.1} parent=15 // pred_fallthru
          _
      $region16: #{tpu_custom_call.1} parent=5 // pred_fallthru
        _
      %p144 = scmp.le.s32.totalorder 1, %s12
      %p145 = scmp.lt.s32.totalorder %s12, 9
      %p146 = pnand %p144, %p145
      %p147 = pneg %p146
      // Predicated region
      $region21: #{tpu_custom_call.1} parent=5 // pred_check
        _
      $region22: #{tpu_custom_call.1} parent=5 // pred_check_branch
        %149 = sbr.rel (%p146) target = $region24
      $region23: #{tpu_custom_call.1} parent=5 // pred_region
        %s150 = ssub.s32 %s12, 1
        %s151 = sand.u32 %s39, 1
        %s152 = scalar_lea.sflag [#allocation5], %s151
        %s153 = sand.u32 %s39, 1
        %s154 = smul.addr %s153, 16
        %s155 = scalar_lea.vmem [#allocation4], %s154
        // Predicated region
        $region25: #{tpu_custom_call.1} parent=23 // pred_check
          %p156 = pneg %p52
        $region26: #{tpu_custom_call.1} parent=23 // pred_check_branch
          %158 = sbr.rel (%p156) target = $region28
        $region27: #{tpu_custom_call.1} parent=23 // pred_region
          %159 = dma.done %s152, 256
        $region28: #{tpu_custom_call.1} parent=23 // pred_fallthru
          _
        %s160 = sand.u32 %s39, 1
        %s161 = scalar_lea.sflag [#allocation5], %s160
        %s162 = sand.u32 %s39, 1
        %s163 = smul.addr %s162, 16
        %s164 = scalar_lea.vmem [#allocation4], %s163
        %p165 = pneg %p52
        %p166 = pneg %p49
        %p167 = pneg %p78
        %p168 = pneg %p75
        %p169 = scmp.lt.s32.totalorder %s21, 1
        %s170 = scalar_select %p169, %s21, 1
        %s171 = smul.addr %s170, 8
        %s172 = scalar_lea.vmem %s1, %s171
        %p173 = pneg %p104
        %p174 = pneg %p101
        %p175 = scmp.lt.s32.totalorder %s21, 1
        %s176 = scalar_select %p175, %s21, 1
        %s177 = smul.addr %s176, 8
        %s178 = scalar_lea.vmem %s2, %s177
        %s179 = smul.u32 2, %s22
        %p180 = scmp.lt.s32.totalorder %s21, 1
        %s181 = scalar_select %p180, %s21, 1
        %s182 = smul.addr %s181, 8
        %s183 = scalar_lea.vmem %s1, %s182
        %p184 = scmp.lt.s32.totalorder %s21, 1
        %s185 = scalar_select %p184, %s21, 1
        %s186 = smul.addr %s185, 8
        %s187 = scalar_lea.vmem %s2, %s186
        %p188 = scmp.eq.s32.totalorder %s22, 0
        // Predicated region
        $region29: #{tpu_custom_call.1} parent=23 // pred_check
          %p189 = pneg %p188
        $region30: #{tpu_custom_call.1} parent=23 // pred_check_branch
          %191 = sbr.rel (%p189) target = $region32
        $region31: #{tpu_custom_call.1} parent=23 // pred_region
          %192 = vst [vmem:[#allocation2] sm:$0xff] 0.0
          %193 = vst [vmem:[#allocation3] sm:$0xff] -inf
        $region32: #{tpu_custom_call.1} parent=23 // pred_fallthru
          _
        %v194 = vld [vmem:[#allocation2] sm:$0xff]
        %v195 = vld [vmem:[#allocation3] sm:$0xff]
        %v196 = vld [vmem:[%s155] sm:$0xff]
        %s197 = scalar_lea.vmem %s155, 8 [#allocation4]
        %v198 = vld [vmem:[%s197] sm:$0xff]
        %v199 = vadd.f32 %v194, %v196
        %v200 = vmax.f32 %v195, %v196
        %v201 = vadd.f32 %v198, 0.0
        %v202 = vadd.f32 %v199, %v201
        %v203 = vmax.f32 %v200, %v198
        %204 = vst [vmem:[#allocation2] sm:$0xff] %v202
        %205 = vst [vmem:[#allocation3] sm:$0xff] %v203
        %p206 = scmp.eq.s32.totalorder %s22, 3
        // Predicated region
        $region33: #{tpu_custom_call.1} parent=23 // pred_check
          %p207 = pneg %p206
        $region34: #{tpu_custom_call.1} parent=23 // pred_check_branch
          %209 = sbr.rel (%p207) target = $region36
        $region35: #{tpu_custom_call.1} parent=23 // pred_region
          %210 = vadd.xlane.f32.xlu0 %v202
          %v211 = vpop.xlane.xlu0 %210
          %v212 = vmul.f32 %v211, 0.0009765625
          %vm213 = vcmask 7168
          %214 = vst.msk [vmem:[%s183] sm:$0xff] %vm213, %v212
          %215 = vmax.xlane.f32.xlu0 %v203
          %v216 = vpop.xlane.xlu0 %215
          %217 = vst.msk [vmem:[%s187] sm:$0xff] %vm213, %v216
        $region36: #{tpu_custom_call.1} parent=23 // pred_fallthru
          _
        %p218 = scmp.lt.s32.totalorder %s21, 1
        %s219 = scalar_select %p218, %s21, 1
        %s220 = smul.addr %s219, 8
        %s221 = scalar_lea.vmem %s1, %s220
        %p222 = scmp.lt.s32.totalorder %s21, 1
        %s223 = scalar_select %p222, %s21, 1
        %s224 = smul.addr %s223, 8
        %s225 = scalar_lea.vmem %s2, %s224
        // Predicated region
        $region37: #{tpu_custom_call.1} parent=23 // pred_check
          %p226 = pneg %p75
        $region38: #{tpu_custom_call.1} parent=23 // pred_check_branch
          %228 = sbr.rel (%p226) target = $region40
        $region39: #{tpu_custom_call.1} parent=23 // pred_region
          _
        $region40: #{tpu_custom_call.1} parent=23 // pred_fallthru
          _
        // Predicated region
        $region41: #{tpu_custom_call.1} parent=23 // pred_check
          %p229 = pneg %p101
        $region42: #{tpu_custom_call.1} parent=23 // pred_check_branch
          %231 = sbr.rel (%p229) target = $region44
        $region43: #{tpu_custom_call.1} parent=23 // pred_region
          _
        $region44: #{tpu_custom_call.1} parent=23 // pred_fallthru
          _
      $region24: #{tpu_custom_call.1} parent=5 // pred_fallthru
        _
      %p232 = scmp.le.s32.totalorder 2, %s12
      // Predicated region
      $region45: #{tpu_custom_call.1} parent=5 // pred_check
        %p233 = pneg %p232
      $region46: #{tpu_custom_call.1} parent=5 // pred_check_branch
        %235 = sbr.rel (%p233) target = $region48
      $region47: #{tpu_custom_call.1} parent=5 // pred_region
        %s236 = ssub.s32 %s12, 2
        // Predicated region
        $region49: #{tpu_custom_call.1} parent=47 // pred_check
          %p237 = pneg %p81
        $region50: #{tpu_custom_call.1} parent=47 // pred_check_branch
          %239 = sbr.rel (%p237) target = $region52
        $region51: #{tpu_custom_call.1} parent=47 // pred_region
          %p240 = scmp.lt.s32.totalorder %s23, 1
          %s241 = scalar_select %p240, %s23, 1
          %s242 = smul.addr %s241, 8
          %s243 = scalar_lea.vmem %s1, %s242
        $region52: #{tpu_custom_call.1} parent=47 // pred_fallthru
          _
        // Predicated region
        $region53: #{tpu_custom_call.1} parent=47 // pred_check
          %p244 = pneg %p107
        $region54: #{tpu_custom_call.1} parent=47 // pred_check_branch
          %246 = sbr.rel (%p244) target = $region56
        $region55: #{tpu_custom_call.1} parent=47 // pred_region
          %p247 = scmp.lt.s32.totalorder %s23, 1
          %s248 = scalar_select %p247, %s23, 1
          %s249 = smul.addr %s248, 8
          %s250 = scalar_lea.vmem %s2, %s249
        $region56: #{tpu_custom_call.1} parent=47 // pred_fallthru
          _
      $region48: #{tpu_custom_call.1} parent=5 // pred_fallthru
        _
    $region6: #{tpu_custom_call.1} parent=1 // loop_footer
      %s16 = sadd.s32 1, %s12
    $region7: #{tpu_custom_call.1} parent=1 // loop_footer_branch
      %11 = sbr.rel target = $region3
    $region8: #{tpu_custom_call.1} parent=1 // loop_exit
      _
    %251 = vsyncpa [#allocation5], 1
    %s252 = scalar_lea.sflag [#allocation5], 1
    %253 = vsyncpa %s252, 1

</llo_original>
